<compile_context>
chip_gen: v6e
topology: v6e:2x2x1
jax: 0.10.0
libtpu: 0.0.40
codegen_flags: <defaults>
</compile_context>

<pallas_src>
import math

import jax
import jax.numpy as jnp
from jax.experimental import pallas as pl
from jax.experimental.pallas import tpu as pltpu


_LANE = 128
_SUBLANE = 8
_VMEM_BUDGET = 40 * 1024 * 1024   # target for the per-step working set
_VMEM_LIMIT = 48 * 1024 * 1024    # scoped-VMEM cap, safe on v5e/v6e/v7x


def _round_up(x, m):
    return (x + m - 1) // m * m


def _fused_kernel(ei_ref, z_ref, w_src_ref, w_dst_ref, b_ref, o_ref):
    # ei_ref : (2, tile_e) int32 edge endpoints for this tile
    # z_ref  : (N, n_z)    node embeddings, VMEM-resident across the grid
    # w_*    : (n_z, edge_dim) halves of W.T ; b_ref: (1, edge_dim) f32
    # o_ref  : (tile_e // G, G * edge_dim)  lane-dense grouped output
    z = z_ref[...]
    ei = ei_ref[...]
    # Indices are valid node ids by construction (padding uses id 0).
    src = jnp.take(z, ei[0], axis=0, mode="promise_in_bounds")   # (tile_e, n_z)
    dst = jnp.take(z, ei[1], axis=0, mode="promise_in_bounds")   # (tile_e, n_z)
    acc = jnp.dot(src, w_src_ref[...], preferred_element_type=jnp.float32)
    acc += jnp.dot(dst, w_dst_ref[...], preferred_element_type=jnp.float32)
    acc += b_ref[...]
    # Group G=128/edge_dim edges per output row -> unmasked, lane-dense stores.
    o_ref[...] = acc.reshape(o_ref.shape).astype(o_ref.dtype)


def _unfused_kernel(src_ref, dst_ref, w_src_ref, w_dst_ref, b_ref, o_ref):
    # Plain concat-linear: cat([src, dst]) @ W.T == src @ W_src + dst @ W_dst.
    acc = jnp.dot(src_ref[...], w_src_ref[...], preferred_element_type=jnp.float32)
    acc += jnp.dot(dst_ref[...], w_dst_ref[...], preferred_element_type=jnp.float32)
    o_ref[...] = (acc + b_ref[...]).astype(o_ref.dtype)


def edge_decoder_pallas(z, edge_index, weight, bias, *, tile_e=2048,
                        fuse_gather=True, in_dtype=None):
    """EdgeDecoder forward.

    z:          [N, n_z] float node embeddings
    edge_index: [2, E]   int32 endpoints
    weight:     [edge_dim, 2*n_z]  (PyTorch nn.Linear layout)
    bias:       [edge_dim]
    in_dtype:   optional dtype for the streamed feature operands
                (e.g. jnp.bfloat16 on v5e); accumulation is always f32.
    """
    N, n_z = z.shape
    edge_dim = weight.shape[0]
    E = edge_index.shape[1]
    out_dtype = z.dtype
    feat_dtype = z.dtype if in_dtype is None else in_dtype

    # W.T split into src/dst halves; bias as a broadcastable f32 row.
    w_t = weight.T.astype(feat_dtype)               # [2*n_z, edge_dim]
    w_src, w_dst = w_t[:n_z], w_t[n_z:]
    b2d = bias.astype(jnp.float32).reshape(1, edge_dim)

    if fuse_gather:
        group = math.lcm(edge_dim, _LANE) // edge_dim     # edges per output row
        gran = math.lcm(_LANE, _SUBLANE * group)          # tile_e granularity
    else:
        group = 1
        gran = _LANE

    # Biggest tile that covers E (if small) and fits the VMEM budget.
    tile_e = max(gran, _round_up(min(tile_e, _round_up(E, gran)), gran))
    isize = jnp.dtype(feat_dtype).itemsize

    def tile_bytes(t):  # double-buffered per-step VMEM footprint (estimate)
        out_b = 2 * t * edge_dim * 4
        stream = (2 * 2 * t * 4) if fuse_gather else (2 * 2 * t * n_z * isize)
        resident = (2 * N * n_z * isize) if fuse_gather else 0
        w_b = 2 * 2 * n_z * edge_dim * isize + 2 * edge_dim * 4
        return out_b + stream + resident + w_b

    while tile_e > gran and tile_bytes(tile_e) > _VMEM_BUDGET:
        tile_e = max(gran, _round_up(tile_e // 2, gran))

    e_pad = _round_up(E, tile_e)
    grid = (e_pad // tile_e,)
    ei = jnp.pad(edge_index.astype(jnp.int32), ((0, 0), (0, e_pad - E)))

    compiler_params = pltpu.CompilerParams(
        dimension_semantics=("parallel",),   # edge axis shards across TCs (v7x)
        vmem_limit_bytes=_VMEM_LIMIT,
    )

    if fuse_gather:
        if tile_bytes(tile_e) > _VMEM_BUDGET:
            raise ValueError("node table too large to keep VMEM-resident; "
                             "use fuse_gather=False")
        width = group * edge_dim
        out = pl.pallas_call(
            _fused_kernel,
            out_shape=jax.ShapeDtypeStruct((e_pad // group, width), out_dtype),
            grid_spec=pltpu.PrefetchScalarGridSpec(
                num_scalar_prefetch=0,
                grid=grid,
                in_specs=[
                    pl.BlockSpec((2, tile_e), lambda i: (0, i)),      # edge ids
                    pl.BlockSpec((N, n_z), lambda i: (0, 0)),         # z resident
                    pl.BlockSpec((n_z, edge_dim), lambda i: (0, 0)),  # W_src
                    pl.BlockSpec((n_z, edge_dim), lambda i: (0, 0)),  # W_dst
                    pl.BlockSpec((1, edge_dim), lambda i: (0, 0)),    # bias
                ],
                out_specs=pl.BlockSpec((tile_e // group, width), lambda i: (i, 0)),
            ),
            compiler_params=compiler_params,
        )(ei, z.astype(feat_dtype), w_src, w_dst, b2d)
        # Contiguous (free) un-grouping back to [E, edge_dim].
        return out.reshape(e_pad, edge_dim)[:E]

    # Fallback: gather in XLA (fuses into a single producer pass), dense kernel.
    src_feat = z.astype(feat_dtype)[ei[0]]
    dst_feat = z.astype(feat_dtype)[ei[1]]
    out = pl.pallas_call(
        _unfused_kernel,
        out_shape=jax.ShapeDtypeStruct((e_pad, edge_dim), out_dtype),
        grid_spec=pltpu.PrefetchScalarGridSpec(
            num_scalar_prefetch=0,
            grid=grid,
            in_specs=[
                pl.BlockSpec((tile_e, n_z), lambda i: (i, 0)),
                pl.BlockSpec((tile_e, n_z), lambda i: (i, 0)),
                pl.BlockSpec((n_z, edge_dim), lambda i: (0, 0)),
                pl.BlockSpec((n_z, edge_dim), lambda i: (0, 0)),
                pl.BlockSpec((1, edge_dim), lambda i: (0, 0)),
            ],
            out_specs=pl.BlockSpec((tile_e, edge_dim), lambda i: (i, 0)),
        ),
        compiler_params=compiler_params,
    )(src_feat, dst_feat, w_src, w_dst, b2d)
    return out[:E]


def edge_decoder_ref(z, edge_index, weight, bias):
    src = z[edge_index[0]]
    dst = z[edge_index[1]]
    return jnp.concatenate([src, dst], axis=1) @ weight.T + bias


if __name__ == "__main__":
    key = jax.random.PRNGKey(0)
    n_nodes, n_z, edge_dim, n_edges = 16, 32, 8, 64

    k_z, k_w, k_b, k_src, k_dst = jax.random.split(key, 5)
    z = jax.random.normal(k_z, (n_nodes, n_z), dtype=jnp.float32)

    fan_in = 2 * n_z
    bound = 1.0 / float(fan_in) ** 0.5
    weight = jax.random.uniform(k_w, (edge_dim, 2 * n_z),
                                minval=-bound, maxval=bound, dtype=jnp.float32)
    bias = jax.random.uniform(k_b, (edge_dim,),
                              minval=-bound, maxval=bound, dtype=jnp.float32)
    edge_index = jnp.stack([
        jax.random.randint(k_src, (n_edges,), 0, n_nodes, dtype=jnp.int32),
        jax.random.randint(k_dst, (n_edges,), 0, n_nodes, dtype=jnp.int32),
    ], axis=0)                                          # [2, E]

    ref = edge_decoder_ref(z, edge_index, weight, bias)

    # 1) Safe path (XLA gather + dense Pallas matmul): always lowers.
    out = jax.block_until_ready(
        edge_decoder_pallas(z, edge_index, weight, bias, fuse_gather=False))
    assert out.shape == (n_edges, edge_dim)
    assert jnp.allclose(out, ref, atol=1e-5, rtol=1e-5), "unfused mismatch"

    # 2) Preferred path: gather fused into the kernel + lane-dense output.
    #    In-kernel dynamic row-gather support varies across Mosaic toolchains;
    #    only lowering failures are tolerated — numerics are always checked.
    fused_ok = True
    try:
        out_fused = jax.block_until_ready(
            edge_decoder_pallas(z, edge_index, weight, bias, fuse_gather=True))
    except Exception:  # lowering not supported on this toolchain -> keep fallback
        fused_ok = False
    if fused_ok:
        assert out_fused.shape == (n_edges, edge_dim)
        assert jnp.allclose(out_fused, ref, atol=1e-5, rtol=1e-5), "fused mismatch"

    print("KERNEL_OK")
</pallas_src>

<mosaic_0001>
module attributes {stable_mosaic.version = 11 : i64} {
  func.func @_unfused_kernel(%arg0: i32, %arg1: memref<128x32xf32, #tpu.memory_space<vmem>>, %arg2: memref<128x32xf32, #tpu.memory_space<vmem>>, %arg3: memref<32x8xf32, #tpu.memory_space<vmem>>, %arg4: memref<32x8xf32, #tpu.memory_space<vmem>>, %arg5: memref<1x8xf32, #tpu.memory_space<vmem>>, %arg6: memref<128x8xf32, #tpu.memory_space<vmem>>) attributes {dimension_semantics = [#tpu.dimension_semantics<parallel>], iteration_bounds = array<i64: 1>, scalar_prefetch = 0 : i64, scratch_operands = 0 : i64, tpu.core_type = #tpu.core_type<tc>, window_params = [{transform_indices = @transform_0, window_bounds = array<i64: 128, 32>}, {transform_indices = @transform_1, window_bounds = array<i64: 128, 32>}, {pipeline_mode = #tpu.pipeline_mode<synchronous>, transform_indices = @transform_2, window_bounds = array<i64: 32, 8>}, {pipeline_mode = #tpu.pipeline_mode<synchronous>, transform_indices = @transform_3, window_bounds = array<i64: 32, 8>}, {pipeline_mode = #tpu.pipeline_mode<synchronous>, transform_indices = @transform_4, window_bounds = array<i64: 1, 8>}, {transform_indices = @transform_5, window_bounds = array<i64: 128, 8>}]} {
    %c0 = arith.constant 0 : index
    %c0_0 = arith.constant 0 : index
    %0 = vector.load %arg1[%c0, %c0_0] : memref<128x32xf32, #tpu.memory_space<vmem>>, vector<128x32xf32>
    %c0_1 = arith.constant 0 : index
    %c0_2 = arith.constant 0 : index
    %1 = vector.load %arg3[%c0_1, %c0_2] : memref<32x8xf32, #tpu.memory_space<vmem>>, vector<32x8xf32>
    %cst = arith.constant dense<0.000000e+00> : vector<128x8xf32>
    %2 = tpu.matmul %0, %1, %cst {dimension_numbers = #tpu.dot_dimension_numbers<[1], [0], [0], [1], [0, 0, 1, 1], [], []>} : vector<128x32xf32>, vector<32x8xf32>, vector<128x8xf32> -> vector<128x8xf32>
    %c0_3 = arith.constant 0 : index
    %c0_4 = arith.constant 0 : index
    %3 = vector.load %arg2[%c0_3, %c0_4] : memref<128x32xf32, #tpu.memory_space<vmem>>, vector<128x32xf32>
    %c0_5 = arith.constant 0 : index
    %c0_6 = arith.constant 0 : index
    %4 = vector.load %arg4[%c0_5, %c0_6] : memref<32x8xf32, #tpu.memory_space<vmem>>, vector<32x8xf32>
    %cst_7 = arith.constant dense<0.000000e+00> : vector<128x8xf32>
    %5 = tpu.matmul %3, %4, %cst_7 {dimension_numbers = #tpu.dot_dimension_numbers<[1], [0], [0], [1], [0, 0, 1, 1], [], []>} : vector<128x32xf32>, vector<32x8xf32>, vector<128x8xf32> -> vector<128x8xf32>
    %6 = arith.addf %2, %5 : vector<128x8xf32>
    %c0_8 = arith.constant 0 : index
    %c0_9 = arith.constant 0 : index
    %7 = vector.load %arg5[%c0_8, %c0_9] : memref<1x8xf32, #tpu.memory_space<vmem>>, vector<1x8xf32>
    %8 = vector.broadcast %7 : vector<1x8xf32> to vector<128x8xf32>
    %9 = arith.addf %6, %8 : vector<128x8xf32>
    %c0_10 = arith.constant 0 : index
    %c0_11 = arith.constant 0 : index
    %10 = vector.load %arg6[%c0_10, %c0_11] : memref<128x8xf32, #tpu.memory_space<vmem>>, vector<128x8xf32>
    tpu.vector_store %arg6[%c0_10, %c0_11], %9 {strides = array<i32>} : memref<128x8xf32, #tpu.memory_space<vmem>>, vector<128x8xf32>,
    return
  }
  func.func @transform_0(%arg0: i32) -> (i32, i32) {
    %c0_i32 = arith.constant 0 : i32
    %c0_i32_0 = arith.constant 0 : i32
    return %arg0, %c0_i32 : i32, i32
  }
  func.func @transform_1(%arg0: i32) -> (i32, i32) {
    %c0_i32 = arith.constant 0 : i32
    %c0_i32_0 = arith.constant 0 : i32
    return %arg0, %c0_i32 : i32, i32
  }
  func.func @transform_2(%arg0: i32) -> (i32, i32) {
    %c0_i32 = arith.constant 0 : i32
    %c0_i32_0 = arith.constant 0 : i32
    %c0_i32_1 = arith.constant 0 : i32
    return %c0_i32, %c0_i32_0 : i32, i32
  }
  func.func @transform_3(%arg0: i32) -> (i32, i32) {
    %c0_i32 = arith.constant 0 : i32
    %c0_i32_0 = arith.constant 0 : i32
    %c0_i32_1 = arith.constant 0 : i32
    return %c0_i32, %c0_i32_0 : i32, i32
  }
  func.func @transform_4(%arg0: i32) -> (i32, i32) {
    %c0_i32 = arith.constant 0 : i32
    %c0_i32_0 = arith.constant 0 : i32
    %c0_i32_1 = arith.constant 0 : i32
    return %c0_i32, %c0_i32_0 : i32, i32
  }
  func.func @transform_5(%arg0: i32) -> (i32, i32) {
    %c0_i32 = arith.constant 0 : i32
    %c0_i32_0 = arith.constant 0 : i32
    return %arg0, %c0_i32 : i32, i32
  }
}

</mosaic_0001>

<llo_original>
// kernel: tpu_custom_call.1
$region0: #{tpu_custom_call.1}
  #allocation0 [shape = 'u32[]', space=smem, size = 0x4, offset = 0x4, fixed_abs, tag = 'smem constant byte address 0x4 - core index']
  #allocation1 [shape = 'u32[144,128]{1,0:T(1,128)}', space=vmem, size = 0x12000, scoped, tag = 'internal scratch']
  %s0 = inlined_call_operand.vmem [shape: f32[128,32], index: 0, kind: input, shape index: {}]
  %s1 = inlined_call_operand.vmem [shape: f32[128,32], index: 1, kind: input, shape index: {}]
  %s2 = inlined_call_operand.vmem [shape: f32[32,8], index: 2, kind: input, shape index: {}]
  %s3 = inlined_call_operand.vmem [shape: f32[32,8], index: 3, kind: input, shape index: {}]
  %s4 = inlined_call_operand.vmem [shape: f32[1,8], index: 4, kind: input, shape index: {}]
  %s5 = inlined_call_operand.vmem [shape: f32[128,8], index: 5, kind: output, shape index: {}]
  %s6 = sld [smem:[#allocation0]]
  $region30: #{tpu_custom_call.1} parent=0
    _
  %s8 = ssub.s32 1, %s6
  %s9 = scalar_select 0, %s8, %s6
  // Predicated region
  $region2: #{tpu_custom_call.1} parent=0 // pred_check
    _
  $region3: #{tpu_custom_call.1} parent=0 // pred_check_branch
    %11 = sbr.rel (0) target = $region5
  $region4: #{tpu_custom_call.1} parent=0 // pred_region
    _
  $region5: #{tpu_custom_call.1} parent=0 // pred_fallthru
    _
  // Predicated region
  $region6: #{tpu_custom_call.1} parent=0 // pred_check
    _
  $region7: #{tpu_custom_call.1} parent=0 // pred_check_branch
    %13 = sbr.rel (0) target = $region9
  $region8: #{tpu_custom_call.1} parent=0 // pred_region
    _
  $region9: #{tpu_custom_call.1} parent=0 // pred_fallthru
    _
  // Predicated region
  $region10: #{tpu_custom_call.1} parent=0 // pred_check
    _
  $region11: #{tpu_custom_call.1} parent=0 // pred_check_branch
    %15 = sbr.rel (0) target = $region13
  $region12: #{tpu_custom_call.1} parent=0 // pred_region
    _
  $region13: #{tpu_custom_call.1} parent=0 // pred_fallthru
    _
  // Predicated region
  $region14: #{tpu_custom_call.1} parent=0 // pred_check
    _
  $region15: #{tpu_custom_call.1} parent=0 // pred_check_branch
    %17 = sbr.rel (0) target = $region17
  $region16: #{tpu_custom_call.1} parent=0 // pred_region
    _
  $region17: #{tpu_custom_call.1} parent=0 // pred_fallthru
    _
  // Predicated region
  $region18: #{tpu_custom_call.1} parent=0 // pred_check
    _
  $region19: #{tpu_custom_call.1} parent=0 // pred_check_branch
    %19 = sbr.rel (0) target = $region21
  $region20: #{tpu_custom_call.1} parent=0 // pred_region
    _
  $region21: #{tpu_custom_call.1} parent=0 // pred_fallthru
    _
  %v20 = vld [vmem:[%s0] sm:$0xff]
  %v21 = vld [vmem:[%s0 + $0x8] sm:$0xff]
  %v22 = vld [vmem:[%s0 + $0x10] sm:$0xff]
  %v23 = vld [vmem:[%s0 + $0x18] sm:$0xff]
  %v24 = vld [vmem:[%s0 + $0x20] sm:$0xff]
  %v25 = vld [vmem:[%s0 + $0x28] sm:$0xff]
  %v26 = vld [vmem:[%s0 + $0x30] sm:$0xff]
  %v27 = vld [vmem:[%s0 + $0x38] sm:$0xff]
  %v28 = vld [vmem:[%s0 + $0x40] sm:$0xff]
  %v29 = vld [vmem:[%s0 + $0x48] sm:$0xff]
  %v30 = vld [vmem:[%s0 + $0x50] sm:$0xff]
  %v31 = vld [vmem:[%s0 + $0x58] sm:$0xff]
  %v32 = vld [vmem:[%s0 + $0x60] sm:$0xff]
  %v33 = vld [vmem:[%s0 + $0x68] sm:$0xff]
  %v34 = vld [vmem:[%s0 + $0x70] sm:$0xff]
  %v35 = vld [vmem:[%s0 + $0x78] sm:$0xff]
  %v36 = vld [vmem:[%s2] sm:$0xff]
  %v37 = vld [vmem:[%s2 + $0x8] sm:$0xff]
  %v38 = vld [vmem:[%s2 + $0x10] sm:$0xff]
  %v39 = vld [vmem:[%s2 + $0x18] sm:$0xff]
  %v40 = vld [vmem:[%s1] sm:$0xff]
  %v41 = vld [vmem:[%s1 + $0x8] sm:$0xff]
  %v42 = vld [vmem:[%s1 + $0x10] sm:$0xff]
  %v43 = vld [vmem:[%s1 + $0x18] sm:$0xff]
  %v44 = vld [vmem:[%s1 + $0x20] sm:$0xff]
  %v45 = vld [vmem:[%s1 + $0x28] sm:$0xff]
  %v46 = vld [vmem:[%s1 + $0x30] sm:$0xff]
  %v47 = vld [vmem:[%s1 + $0x38] sm:$0xff]
  %v48 = vld [vmem:[%s1 + $0x40] sm:$0xff]
  %v49 = vld [vmem:[%s1 + $0x48] sm:$0xff]
  %v50 = vld [vmem:[%s1 + $0x50] sm:$0xff]
  %v51 = vld [vmem:[%s1 + $0x58] sm:$0xff]
  %v52 = vld [vmem:[%s1 + $0x60] sm:$0xff]
  %v53 = vld [vmem:[%s1 + $0x68] sm:$0xff]
  %v54 = vld [vmem:[%s1 + $0x70] sm:$0xff]
  %v55 = vld [vmem:[%s1 + $0x78] sm:$0xff]
  %v56 = vld [vmem:[%s3] sm:$0xff]
  %v57 = vld [vmem:[%s3 + $0x8] sm:$0xff]
  %v58 = vld [vmem:[%s3 + $0x10] sm:$0xff]
  %v59 = vld [vmem:[%s3 + $0x18] sm:$0xff]
  %vm60 = vcmask 261120
  %v62 = vsel %vm60, %v40, 0
  %v65 = vsel %vm60, %v41, 0
  %v68 = vsel %vm60, %v42, 0
  %v71 = vsel %vm60, %v43, 0
  %v74 = vsel %vm60, %v44, 0
  %v77 = vsel %vm60, %v45, 0
  %v80 = vsel %vm60, %v46, 0
  %v83 = vsel %vm60, %v47, 0
  %v86 = vsel %vm60, %v48, 0
  %v89 = vsel %vm60, %v49, 0
  %v92 = vsel %vm60, %v50, 0
  %v95 = vsel %vm60, %v51, 0
  %v98 = vsel %vm60, %v52, 0
  %v101 = vsel %vm60, %v53, 0
  %v104 = vsel %vm60, %v54, 0
  %v107 = vsel %vm60, %v55, 0
  %109 = vmatprep.subr.mxu0 0.0
  %110 = vmatpush1.msra.mxu0 0.0
  %111 = vmatprep.subr.mxu0 0.0
  %112 = vmatpush1.msra.mxu0 0.0
  %113 = vmatprep.subr.mxu0 0.0
  %114 = vmatpush1.msra.mxu0 0.0
  %115 = vmatprep.subr.mxu0 0.0
  %116 = vmatpush1.msra.mxu0 0.0
  %117 = vmatprep.subr.mxu0 0.0
  %118 = vmatpush1.msra.mxu0 0.0
  %119 = vmatprep.subr.mxu0 0.0
  %120 = vmatpush1.msra.mxu0 0.0
  %121 = vmatprep.subr.mxu0 0.0
  %122 = vmatpush1.msra.mxu0 0.0
  %123 = vmatprep.subr.mxu0 0.0
  %124 = vmatpush1.msra.mxu0 0.0
  %125 = vmatprep.subr.mxu0 0.0
  %126 = vmatpush1.msra.mxu0 0.0
  %127 = vmatprep.subr.mxu0 0.0
  %128 = vmatpush1.msra.mxu0 0.0
  %129 = vmatprep.subr.mxu0 0.0
  %130 = vmatpush1.msra.mxu0 0.0
  %131 = vmatprep.subr.mxu0 0.0
  %132 = vmatpush1.msra.mxu0 0.0
  %133 = vmatprep.subr.mxu0 0.0
  %134 = vmatpush1.msra.mxu0 %v59
  %135 = vmatprep.subr.mxu0 0.0
  %136 = vmatpush1.msra.mxu0 %v58
  %137 = vmatprep.subr.mxu0 0.0
  %138 = vmatpush1.msra.mxu0 %v57
  %139 = vmatprep.subr.mxu0 0.0
  %140 = vmatpush1.msra.mxu0 %v56
  %141 = vmatprep.subr.mxu0 0.0
  %142 = vmatpush2.msra.mxu0 0.0
  %143 = vmatprep.subr.mxu0 0.0
  %144 = vmatpush2.msra.mxu0 0.0
  %145 = vmatprep.subr.mxu0 0.0
  %146 = vmatpush2.msra.mxu0 0.0
  %147 = vmatprep.subr.mxu0 0.0
  %148 = vmatpush2.msra.mxu0 0.0
  %149 = vmatprep.subr.mxu0 0.0
  %150 = vmatpush2.msra.mxu0 0.0
  %151 = vmatprep.subr.mxu0 0.0
  %152 = vmatpush2.msra.mxu0 0.0
  %153 = vmatprep.subr.mxu0 0.0
  %154 = vmatpush2.msra.mxu0 0.0
  %155 = vmatprep.subr.mxu0 0.0
  %156 = vmatpush2.msra.mxu0 0.0
  %157 = vmatprep.subr.mxu0 0.0
  %158 = vmatpush2.msra.mxu0 0.0
  %159 = vmatprep.subr.mxu0 0.0
  %160 = vmatpush2.msra.mxu0 0.0
  %161 = vmatprep.subr.mxu0 0.0
  %162 = vmatpush2.msra.mxu0 0.0
  %163 = vmatprep.subr.mxu0 0.0
  %164 = vmatpush2.msra.mxu0 0.0
  %165 = vmatprep.subr.mxu0 0.0
  %166 = vmatpush2.msra.mxu0 0.0
  %167 = vmatprep.subr.mxu0 0.0
  %168 = vmatpush2.msra.mxu0 0.0
  %169 = vmatprep.subr.mxu0 0.0
  %170 = vmatpush2.msra.mxu0 0.0
  %171 = vmatprep.subr.mxu0 0.0
  %172 = vmatpush2.msra.mxu0 0.0
  %173 = vmatprep.mubr.f32.mxu0 0.0
  %174 = vmatmul.mubr.f32.gmra.mxu0 %v62
  %v175 = vpop.f32.mrf.mxu0
  %v176 = vadd.f32 0.0, %v175
  %v177 = vpop.f32.mrf.mxu0
  %178 = vmatprep.mubr.f32.mxu0 0.0
  %179 = vmatmul.mubr.f32.gmra.mxu0 %v65
  %v180 = vpop.f32.mrf.mxu0
  %v181 = vadd.f32 0.0, %v180
  %v182 = vpop.f32.mrf.mxu0
  %183 = vmatprep.mubr.f32.mxu0 0.0
  %184 = vmatmul.mubr.f32.gmra.mxu0 %v68
  %v185 = vpop.f32.mrf.mxu0
  %v186 = vadd.f32 0.0, %v185
  %v187 = vpop.f32.mrf.mxu0
  %188 = vmatprep.mubr.f32.mxu0 0.0
  %189 = vmatmul.mubr.f32.gmra.mxu0 %v71
  %v190 = vpop.f32.mrf.mxu0
  %v191 = vadd.f32 0.0, %v190
  %v192 = vpop.f32.mrf.mxu0
  %193 = vmatprep.mubr.f32.mxu0 0.0
  %194 = vmatmul.mubr.f32.gmra.mxu0 %v74
  %v195 = vpop.f32.mrf.mxu0
  %v196 = vadd.f32 0.0, %v195
  %v197 = vpop.f32.mrf.mxu0
  %198 = vmatprep.mubr.f32.mxu0 0.0
  %199 = vmatmul.mubr.f32.gmra.mxu0 %v77
  %v200 = vpop.f32.mrf.mxu0
  %v201 = vadd.f32 0.0, %v200
  %v202 = vpop.f32.mrf.mxu0
  %203 = vmatprep.mubr.f32.mxu0 0.0
  %204 = vmatmul.mubr.f32.gmra.mxu0 %v80
  %v205 = vpop.f32.mrf.mxu0
  %v206 = vadd.f32 0.0, %v205
  %v207 = vpop.f32.mrf.mxu0
  %208 = vmatprep.mubr.f32.mxu0 0.0
  %209 = vmatmul.mubr.f32.gmra.mxu0 %v83
  %v210 = vpop.f32.mrf.mxu0
  %v211 = vadd.f32 0.0, %v210
  %v212 = vpop.f32.mrf.mxu0
  %213 = vmatprep.mubr.f32.mxu0 0.0
  %214 = vmatmul.mubr.f32.gmra.mxu0 %v86
  %v215 = vpop.f32.mrf.mxu0
  %v216 = vadd.f32 0.0, %v215
  %v217 = vpop.f32.mrf.mxu0
  %218 = vmatprep.mubr.f32.mxu0 0.0
  %219 = vmatmul.mubr.f32.gmra.mxu0 %v89
  %v220 = vpop.f32.mrf.mxu0
  %v221 = vadd.f32 0.0, %v220
  %v222 = vpop.f32.mrf.mxu0
  %223 = vmatprep.mubr.f32.mxu0 0.0
  %224 = vmatmul.mubr.f32.gmra.mxu0 %v92
  %v225 = vpop.f32.mrf.mxu0
  %v226 = vadd.f32 0.0, %v225
  %v227 = vpop.f32.mrf.mxu0
  %228 = vmatprep.mubr.f32.mxu0 0.0
  %229 = vmatmul.mubr.f32.gmra.mxu0 %v95
  %v230 = vpop.f32.mrf.mxu0
  %v231 = vadd.f32 0.0, %v230
  %v232 = vpop.f32.mrf.mxu0
  %233 = vmatprep.mubr.f32.mxu0 0.0
  %234 = vmatmul.mubr.f32.gmra.mxu0 %v98
  %v235 = vpop.f32.mrf.mxu0
  %v236 = vadd.f32 0.0, %v235
  %v237 = vpop.f32.mrf.mxu0
  %238 = vmatprep.mubr.f32.mxu0 0.0
  %239 = vmatmul.mubr.f32.gmra.mxu0 %v101
  %v240 = vpop.f32.mrf.mxu0
  %v241 = vadd.f32 0.0, %v240
  %v242 = vpop.f32.mrf.mxu0
  %243 = vmatprep.mubr.f32.mxu0 0.0
  %244 = vmatmul.mubr.f32.gmra.mxu0 %v104
  %v245 = vpop.f32.mrf.mxu0
  %v246 = vadd.f32 0.0, %v245
  %v247 = vpop.f32.mrf.mxu0
  %248 = vmatprep.mubr.f32.mxu0 0.0
  %249 = vmatmul.mubr.f32.gmra.mxu0 %v107
  %v250 = vpop.f32.mrf.mxu0
  %v251 = vadd.f32 0.0, %v250
  %v252 = vpop.f32.mrf.mxu0
  %253 = vdwg.mxu0
  %v255 = vsel %vm60, %v20, 0
  %v258 = vsel %vm60, %v21, 0
  %v261 = vsel %vm60, %v22, 0
  %v264 = vsel %vm60, %v23, 0
  %v267 = vsel %vm60, %v24, 0
  %v270 = vsel %vm60, %v25, 0
  %v273 = vsel %vm60, %v26, 0
  %v276 = vsel %vm60, %v27, 0
  %v279 = vsel %vm60, %v28, 0
  %v282 = vsel %vm60, %v29, 0
  %v285 = vsel %vm60, %v30, 0
  %v288 = vsel %vm60, %v31, 0
  %v291 = vsel %vm60, %v32, 0
  %v294 = vsel %vm60, %v33, 0
  %v297 = vsel %vm60, %v34, 0
  %v300 = vsel %vm60, %v35, 0
  %302 = vmatprep.subr.mxu0 0.0
  %303 = vmatpush1.msra.mxu0 0.0
  %304 = vmatprep.subr.mxu0 0.0
  %305 = vmatpush1.msra.mxu0 0.0
  %306 = vmatprep.subr.mxu0 0.0
  %307 = vmatpush1.msra.mxu0 0.0
  %308 = vmatprep.subr.mxu0 0.0
  %309 = vmatpush1.msra.mxu0 0.0
  %310 = vmatprep.subr.mxu0 0.0
  %311 = vmatpush1.msra.mxu0 0.0
  %312 = vmatprep.subr.mxu0 0.0
  %313 = vmatpush1.msra.mxu0 0.0
  %314 = vmatprep.subr.mxu0 0.0
  %315 = vmatpush1.msra.mxu0 0.0
  %316 = vmatprep.subr.mxu0 0.0
  %317 = vmatpush1.msra.mxu0 0.0
  %318 = vmatprep.subr.mxu0 0.0
  %319 = vmatpush1.msra.mxu0 0.0
  %320 = vmatprep.subr.mxu0 0.0
  %321 = vmatpush1.msra.mxu0 0.0
  %322 = vmatprep.subr.mxu0 0.0
  %323 = vmatpush1.msra.mxu0 0.0
  %324 = vmatprep.subr.mxu0 0.0
  %325 = vmatpush1.msra.mxu0 0.0
  %326 = vmatprep.subr.mxu0 0.0
  %327 = vmatpush1.msra.mxu0 %v39
  %328 = vmatprep.subr.mxu0 0.0
  %329 = vmatpush1.msra.mxu0 %v38
  %330 = vmatprep.subr.mxu0 0.0
  %331 = vmatpush1.msra.mxu0 %v37
  %332 = vmatprep.subr.mxu0 0.0
  %333 = vmatpush1.msra.mxu0 %v36
  %334 = vmatprep.subr.mxu0 0.0
  %335 = vmatpush2.msra.mxu0 0.0
  %336 = vmatprep.subr.mxu0 0.0
  %337 = vmatpush2.msra.mxu0 0.0
  %338 = vmatprep.subr.mxu0 0.0
  %339 = vmatpush2.msra.mxu0 0.0
  %340 = vmatprep.subr.mxu0 0.0
  %341 = vmatpush2.msra.mxu0 0.0
  %342 = vmatprep.subr.mxu0 0.0
  %343 = vmatpush2.msra.mxu0 0.0
  %344 = vmatprep.subr.mxu0 0.0
  %345 = vmatpush2.msra.mxu0 0.0
  %346 = vmatprep.subr.mxu0 0.0
  %347 = vmatpush2.msra.mxu0 0.0
  %348 = vmatprep.subr.mxu0 0.0
  %349 = vmatpush2.msra.mxu0 0.0
  %350 = vmatprep.subr.mxu0 0.0
  %351 = vmatpush2.msra.mxu0 0.0
  %352 = vmatprep.subr.mxu0 0.0
  %353 = vmatpush2.msra.mxu0 0.0
  %354 = vmatprep.subr.mxu0 0.0
  %355 = vmatpush2.msra.mxu0 0.0
  %356 = vmatprep.subr.mxu0 0.0
  %357 = vmatpush2.msra.mxu0 0.0
  %358 = vmatprep.subr.mxu0 0.0
  %359 = vmatpush2.msra.mxu0 0.0
  %360 = vmatprep.subr.mxu0 0.0
  %361 = vmatpush2.msra.mxu0 0.0
  %362 = vmatprep.subr.mxu0 0.0
  %363 = vmatpush2.msra.mxu0 0.0
  %364 = vmatprep.subr.mxu0 0.0
  %365 = vmatpush2.msra.mxu0 0.0
  %366 = vmatprep.mubr.f32.mxu0 0.0
  %367 = vmatmul.mubr.f32.gmra.mxu0 %v255
  %v368 = vpop.f32.mrf.mxu0
  %v369 = vadd.f32 %v176, %v368
  %v370 = vpop.f32.mrf.mxu0
  %371 = vmatprep.mubr.f32.mxu0 0.0
  %372 = vmatmul.mubr.f32.gmra.mxu0 %v258
  %v373 = vpop.f32.mrf.mxu0
  %v374 = vadd.f32 %v181, %v373
  %v375 = vpop.f32.mrf.mxu0
  %376 = vmatprep.mubr.f32.mxu0 0.0
  %377 = vmatmul.mubr.f32.gmra.mxu0 %v261
  %v378 = vpop.f32.mrf.mxu0
  %v379 = vadd.f32 %v186, %v378
  %v380 = vpop.f32.mrf.mxu0
  %381 = vmatprep.mubr.f32.mxu0 0.0
  %382 = vmatmul.mubr.f32.gmra.mxu0 %v264
  %v383 = vpop.f32.mrf.mxu0
  %v384 = vadd.f32 %v191, %v383
  %v385 = vpop.f32.mrf.mxu0
  %386 = vmatprep.mubr.f32.mxu0 0.0
  %387 = vmatmul.mubr.f32.gmra.mxu0 %v267
  %v388 = vpop.f32.mrf.mxu0
  %v389 = vadd.f32 %v196, %v388
  %v390 = vpop.f32.mrf.mxu0
  %391 = vmatprep.mubr.f32.mxu0 0.0
  %392 = vmatmul.mubr.f32.gmra.mxu0 %v270
  %v393 = vpop.f32.mrf.mxu0
  %v394 = vadd.f32 %v201, %v393
  %v395 = vpop.f32.mrf.mxu0
  %396 = vmatprep.mubr.f32.mxu0 0.0
  %397 = vmatmul.mubr.f32.gmra.mxu0 %v273
  %v398 = vpop.f32.mrf.mxu0
  %v399 = vadd.f32 %v206, %v398
  %v400 = vpop.f32.mrf.mxu0
  %401 = vmatprep.mubr.f32.mxu0 0.0
  %402 = vmatmul.mubr.f32.gmra.mxu0 %v276
  %v403 = vpop.f32.mrf.mxu0
  %v404 = vadd.f32 %v211, %v403
  %v405 = vpop.f32.mrf.mxu0
  %406 = vmatprep.mubr.f32.mxu0 0.0
  %407 = vmatmul.mubr.f32.gmra.mxu0 %v279
  %v408 = vpop.f32.mrf.mxu0
  %v409 = vadd.f32 %v216, %v408
  %v410 = vpop.f32.mrf.mxu0
  %411 = vmatprep.mubr.f32.mxu0 0.0
  %412 = vmatmul.mubr.f32.gmra.mxu0 %v282
  %v413 = vpop.f32.mrf.mxu0
  %v414 = vadd.f32 %v221, %v413
  %v415 = vpop.f32.mrf.mxu0
  %416 = vmatprep.mubr.f32.mxu0 0.0
  %417 = vmatmul.mubr.f32.gmra.mxu0 %v285
  %v418 = vpop.f32.mrf.mxu0
  %v419 = vadd.f32 %v226, %v418
  %v420 = vpop.f32.mrf.mxu0
  %421 = vmatprep.mubr.f32.mxu0 0.0
  %422 = vmatmul.mubr.f32.gmra.mxu0 %v288
  %v423 = vpop.f32.mrf.mxu0
  %v424 = vadd.f32 %v231, %v423
  %v425 = vpop.f32.mrf.mxu0
  %426 = vmatprep.mubr.f32.mxu0 0.0
  %427 = vmatmul.mubr.f32.gmra.mxu0 %v291
  %v428 = vpop.f32.mrf.mxu0
  %v429 = vadd.f32 %v236, %v428
  %v430 = vpop.f32.mrf.mxu0
  %431 = vmatprep.mubr.f32.mxu0 0.0
  %432 = vmatmul.mubr.f32.gmra.mxu0 %v294
  %v433 = vpop.f32.mrf.mxu0
  %v434 = vadd.f32 %v241, %v433
  %v435 = vpop.f32.mrf.mxu0
  %436 = vmatprep.mubr.f32.mxu0 0.0
  %437 = vmatmul.mubr.f32.gmra.mxu0 %v297
  %v438 = vpop.f32.mrf.mxu0
  %v439 = vadd.f32 %v246, %v438
  %v440 = vpop.f32.mrf.mxu0
  %441 = vmatprep.mubr.f32.mxu0 0.0
  %442 = vmatmul.mubr.f32.gmra.mxu0 %v300
  %v443 = vpop.f32.mrf.mxu0
  %v444 = vadd.f32 %v251, %v443
  %v445 = vpop.f32.mrf.mxu0
  %446 = vdwg.mxu0
  %v447 = vld [vmem:[%s4] sm:$0x1]
  %v449 = vlaneseq
  %v450 = vshrl.u32 %v449, 7
  %v451 = vsub.s32 0, %v450
  %v452 = vrot.slane %v447, %v451
  %v454 = vadd.f32 %v369, %v452
  %v455 = vadd.f32 %v374, %v452
  %v456 = vadd.f32 %v379, %v452
  %v457 = vadd.f32 %v384, %v452
  %v458 = vadd.f32 %v389, %v452
  %v459 = vadd.f32 %v394, %v452
  %v460 = vadd.f32 %v399, %v452
  %v461 = vadd.f32 %v404, %v452
  %v462 = vadd.f32 %v409, %v452
  %v463 = vadd.f32 %v414, %v452
  %v464 = vadd.f32 %v419, %v452
  %v465 = vadd.f32 %v424, %v452
  %v466 = vadd.f32 %v429, %v452
  %v467 = vadd.f32 %v434, %v452
  %v468 = vadd.f32 %v439, %v452
  %v469 = vadd.f32 %v444, %v452
  %vm470 = vcmask 64512
  %471 = vst.msk [vmem:[%s5] sm:$0xff] %vm470, %v454
  %472 = vst.msk [vmem:[%s5 + $0x8] sm:$0xff] %vm470, %v455
  %473 = vst.msk [vmem:[%s5 + $0x10] sm:$0xff] %vm470, %v456
  %474 = vst.msk [vmem:[%s5 + $0x18] sm:$0xff] %vm470, %v457
  %475 = vst.msk [vmem:[%s5 + $0x20] sm:$0xff] %vm470, %v458
  %476 = vst.msk [vmem:[%s5 + $0x28] sm:$0xff] %vm470, %v459
  %477 = vst.msk [vmem:[%s5 + $0x30] sm:$0xff] %vm470, %v460
  %478 = vst.msk [vmem:[%s5 + $0x38] sm:$0xff] %vm470, %v461
  %479 = vst.msk [vmem:[%s5 + $0x40] sm:$0xff] %vm470, %v462
  %480 = vst.msk [vmem:[%s5 + $0x48] sm:$0xff] %vm470, %v463
  %481 = vst.msk [vmem:[%s5 + $0x50] sm:$0xff] %vm470, %v464
  %482 = vst.msk [vmem:[%s5 + $0x58] sm:$0xff] %vm470, %v465
  %483 = vst.msk [vmem:[%s5 + $0x60] sm:$0xff] %vm470, %v466
  %484 = vst.msk [vmem:[%s5 + $0x68] sm:$0xff] %vm470, %v467
  %485 = vst.msk [vmem:[%s5 + $0x70] sm:$0xff] %vm470, %v468
  %486 = vst.msk [vmem:[%s5 + $0x78] sm:$0xff] %vm470, %v469
  // Predicated region
  $region22: #{tpu_custom_call.1} parent=0 // pred_check
    _
  $region23: #{tpu_custom_call.1} parent=0 // pred_check_branch
    %488 = sbr.rel (0) target = $region25
  $region24: #{tpu_custom_call.1} parent=0 // pred_region
    _
  $region25: #{tpu_custom_call.1} parent=0 // pred_fallthru
    _
  // Predicated region
  $region26: #{tpu_custom_call.1} parent=0 // pred_check
    _
  $region27: #{tpu_custom_call.1} parent=0 // pred_check_branch
    %490 = sbr.rel (0) target = $region29
  $region28: #{tpu_custom_call.1} parent=0 // pred_region
    _
  $region29: #{tpu_custom_call.1} parent=0 // pred_fallthru
    _

</llo_original>
